<compile_context>
chip_gen: v5e
topology: v5e:2x2
jax: 0.10.0
libtpu: 0.0.40
codegen_flags: <defaults>
</compile_context>

<pallas_src>
import jax
import jax.numpy as jnp
from jax import lax
from jax.experimental import pallas as pl
from jax.experimental.pallas import tpu as pltpu


def _celu(x, alpha=1.0):
    # CELU(x) = max(0, x) + min(0, alpha * (exp(x / alpha) - 1))
    return jnp.maximum(x, 0.0) + jnp.minimum(0.0, alpha * (jnp.exp(x / alpha) - 1.0))


# ---------------------------------------------------------------------------
# Fused kernel: pool + gate + scale for a (Nb*C, HW) block per grid step.
# ---------------------------------------------------------------------------
def _make_fused_kernel(nb, c, hw, chunk):
    n_full = hw // chunk
    rem = hw - n_full * chunk
    inv_hw = 1.0 / float(hw)

    def kernel(x_ref, w1_ref, b1_ref, w2_ref, b2_ref, o_ref, score_ref):
        # x_ref/o_ref : (Nb*C, HW)  Nb samples folded onto sublanes
        # w1_ref      : (Cmid, C)   f32 (pre-cast in the wrapper, resident)
        # b1_ref      : (Cmid, 1)   f32 column bias
        # w2_ref      : (C, Cmid)   f32
        # b2_ref      : (C, 1)      f32 column bias
        # score_ref   : (Nb*C, 1)   VMEM scratch, x dtype

        # ---- AdaptiveAvgPool2d(1): f32 accumulation over lane chunks --------
        # (no full-block f32 temporary; temp is capped at Nb*C*chunk*4 bytes)
        def reduce_body(j, acc):
            i = pl.multiple_of(j * chunk, chunk)
            sl = x_ref[:, pl.ds(i, chunk)]
            return acc + jnp.sum(sl.astype(jnp.float32), axis=-1, keepdims=True)

        acc = lax.fori_loop(0, n_full, reduce_body,
                            jnp.zeros((nb * c, 1), jnp.float32))
        if rem:
            tail = x_ref[:, pl.ds(n_full * chunk, rem)]
            acc = acc + jnp.sum(tail.astype(jnp.float32), axis=-1, keepdims=True)
        pooled = acc * inv_hw                                    # (Nb*C, 1) f32

        # ---- tiny per-sample channel-MLP gate (column oriented, f32) --------
        # Two degenerate matvecs per sample; pure latency hidden under the DMA.
        for s in range(nb):
            p_s = pooled[s * c:(s + 1) * c, :]                   # (C, 1)
            h = jnp.dot(w1_ref[...], p_s,
                        preferred_element_type=jnp.float32) + b1_ref[...]
            h = _celu(h)
            logit = jnp.dot(w2_ref[...], h,
                            preferred_element_type=jnp.float32) + b2_ref[...]
            score_ref[s * c:(s + 1) * c, :] = (
                jax.nn.sigmoid(logit).astype(score_ref.dtype))

        gate = score_ref[...]                                    # (Nb*C, 1)

        # ---- scale: per-chunk, native dtype, sublane-aligned broadcast ------
        @pl.loop(0, n_full)
        def _(j):
            i = pl.multiple_of(j * chunk, chunk)
            o_ref[:, pl.ds(i, chunk)] = (
                x_ref[:, pl.ds(i, chunk)] * gate).astype(o_ref.dtype)

        if rem:
            o_ref[:, pl.ds(n_full * chunk, rem)] = (
                x_ref[:, pl.ds(n_full * chunk, rem)] * gate).astype(o_ref.dtype)

    return kernel


# ---------------------------------------------------------------------------
# Two-stage fallback: lane-dense elementwise scale (gate computed outside).
# ---------------------------------------------------------------------------
def _scale_kernel(x_ref, s_ref, o_ref):
    # x_ref: (C, T)   s_ref: (C, 1)   o_ref: (C, T)
    o_ref[...] = (x_ref[...] * s_ref[...]).astype(o_ref.dtype)


# ---------------------------------------------------------------------------
# Static tiling heuristics.
# ---------------------------------------------------------------------------
def _pick_batch_block(n, per_sample_bytes, target_bytes=1 << 20, min_steps=2):
    """Largest divisor Nb of n with Nb*per_sample <= target and >= min_steps steps."""
    if n <= 1 or per_sample_bytes >= target_bytes:
        return 1
    cap = min(target_bytes // per_sample_bytes, max(1, n // min_steps), n)
    cap = max(int(cap), 1)
    for nb in range(cap, 0, -1):
        if n % nb == 0:
            return nb
    return 1


def _pick_lane_chunk(hw, rows, f32_temp_budget=2 << 20):
    """Lane chunk (multiple of 128) so the in-kernel f32 temp stays ~<= budget."""
    if hw <= 128:
        return hw
    by_budget = max(128, (f32_temp_budget // (rows * 4)) // 128 * 128)
    return int(min(2048, by_budget, (hw // 128) * 128))


def _pick_hw_tile(hw, c, itemsize, byte_budget):
    """Lane-dense tile for the fallback scale kernel; ragged last tile allowed."""
    if hw < 128:
        return hw
    hw_pad = -(-hw // 128) * 128
    for t in (8192, 4096, 2048, 1024, 512, 256, 128):
        if t <= hw_pad and 4 * c * t * itemsize <= byte_budget:
            return t
    # TODO(synk): also tile along C when channels are so large that even a
    # 128-lane tile misses the budget; clamp to 128 lanes for now.
    return 128


# ---------------------------------------------------------------------------
# Public wrapper.
# ---------------------------------------------------------------------------
def channel_attention(x, w1, b1, w2, b2, *, donate_input=False,
                      vmem_budget_bytes=None, out_buffers=None,
                      batch_block=None):
    """x: (N, C, H, W). w1: (Cmid, C), b1: (Cmid,), w2: (C, Cmid), b2: (C,)."""
    N, C, H, W = x.shape
    Cmid = w1.shape[0]
    HW = H * W
    itemsize = jnp.dtype(x.dtype).itemsize

    # Pre-cast params to f32 once in the wrapper (resident blocks; no per-step
    # in-kernel casts). Biases column-oriented to match the gate math.
    w1f = w1.astype(jnp.float32)                       # (Cmid, C)
    w2f = w2.astype(jnp.float32)                       # (C, Cmid)
    b1f = b1.astype(jnp.float32)
    b2f = b2.astype(jnp.float32)
    b1_col = b1f.reshape(Cmid, 1)
    b2_col = b2f.reshape(C, 1)

    # --- VMEM budgeting ------------------------------------------------------
    try:
        vmem_cap = int(getattr(pltpu.get_tpu_info(), "vmem_capacity_bytes",
                               64 << 20))
    except Exception:
        vmem_cap = 64 << 20
    budget = (int(vmem_budget_bytes) if vmem_budget_bytes is not None
              else int(vmem_cap * 0.75))
    hard_cap = max(budget, int(vmem_cap * 0.90))

    param_bytes = 4 * (w1.size + w2.size + b1.size + b2.size)
    per_sample_bytes = C * HW * itemsize
    x_bytes = N * per_sample_bytes
    io_aliases = {0: 0} if donate_input else {}

    # --- fused-path configuration ---------------------------------------------
    nb = batch_block if batch_block is not None else \
        _pick_batch_block(N, per_sample_bytes)
    if nb < 1 or nb > N or N % nb != 0:
        nb = 1
    chunk = _pick_lane_chunk(HW, nb * C)
    block_bytes = nb * per_sample_bytes
    # In-kernel temporaries: one f32 chunk + one native-dtype product chunk
    # plus the f32 accumulator / gate columns.
    temp_bytes = nb * C * chunk * (4 + itemsize) + 16 * nb * C

    auto_buffers = out_buffers is None
    if auto_buffers:
        if 4 * block_bytes + 2 * param_bytes + temp_bytes <= budget:
            out_buffers = 2         # plain double-buffered output
        else:
            out_buffers = 1         # single-buffer output: keeps v7x shapes fused
    fused_need = (2 + out_buffers) * block_bytes + 2 * param_bytes + temp_bytes

    def _run_fused():
        rows = nb * C
        xg = x.reshape(N // nb, rows, HW)
        if out_buffers >= 2:
            out_spec = pl.BlockSpec((pl.Squeezed(), rows, HW),
                                    lambda n: (n, 0, 0))
        else:
            out_spec = pl.BlockSpec((pl.Squeezed(), rows, HW),
                                    lambda n: (n, 0, 0),
                                    pipeline_mode=pl.Buffered(out_buffers))
        cost = pl.CostEstimate(
            flops=int(N * (2 * C * HW + 4 * C * Cmid)),
            transcendentals=int(N * (Cmid + C)),
            bytes_accessed=int(2 * x_bytes + param_bytes),
        )
        vmem_limit = int(min(hard_cap, max(fused_need + (8 << 20), 32 << 20)))
        out = pl.pallas_call(
            _make_fused_kernel(nb, C, HW, chunk),
            out_shape=jax.ShapeDtypeStruct((N // nb, rows, HW), x.dtype),
            grid_spec=pltpu.PrefetchScalarGridSpec(
                num_scalar_prefetch=0,
                grid=(N // nb,),
                in_specs=[
                    pl.BlockSpec((pl.Squeezed(), rows, HW), lambda n: (n, 0, 0)),
                    pl.BlockSpec((Cmid, C), lambda n: (0, 0)),
                    pl.BlockSpec((Cmid, 1), lambda n: (0, 0)),
                    pl.BlockSpec((C, Cmid), lambda n: (0, 0)),
                    pl.BlockSpec((C, 1), lambda n: (0, 0)),
                ],
                out_specs=out_spec,
                scratch_shapes=[pltpu.VMEM((rows, 1), x.dtype)],
            ),
            compiler_params=pltpu.CompilerParams(
                dimension_semantics=("parallel",),
                vmem_limit_bytes=vmem_limit,
            ),
            cost_estimate=cost,
            input_output_aliases=io_aliases,
        )(xg, w1f, b1_col, w2f, b2_col)
        return out.reshape(N, C, H, W)

    def _run_two_stage():
        x_flat = x.reshape(N, C, HW)
        # Gate is ~4*C*Cmid flops/sample: negligible; compute in f32 outside.
        pooled = jnp.mean(x_flat.astype(jnp.float32), axis=-1)           # (N, C)
        h = _celu(pooled @ w1f.T + b1f)                                  # (N, Cmid)
        score = jax.nn.sigmoid(h @ w2f.T + b2f)                          # (N, C)
        score_col = score.astype(x.dtype).reshape(N, C, 1)

        tile = _pick_hw_tile(HW, C, itemsize, budget)
        n_tiles = int(pl.cdiv(HW, tile))
        need = 4 * C * tile * itemsize + 2 * C * itemsize
        vmem_limit = int(min(hard_cap, max(need + (8 << 20), 32 << 20)))
        cost = pl.CostEstimate(
            flops=int(N * C * HW),
            transcendentals=0,
            bytes_accessed=int(2 * x_bytes + N * C * itemsize),
        )
        out = pl.pallas_call(
            _scale_kernel,
            out_shape=jax.ShapeDtypeStruct((N, C, HW), x.dtype),
            grid_spec=pltpu.PrefetchScalarGridSpec(
                num_scalar_prefetch=0,
                grid=(N, n_tiles),
                in_specs=[
                    pl.BlockSpec((pl.Squeezed(), C, tile), lambda n, t: (n, 0, t)),
                    pl.BlockSpec((pl.Squeezed(), C, 1), lambda n, t: (n, 0, 0)),
                ],
                out_specs=pl.BlockSpec((pl.Squeezed(), C, tile),
                                       lambda n, t: (n, 0, t)),
            ),
            compiler_params=pltpu.CompilerParams(
                dimension_semantics=("parallel", "parallel"),
                vmem_limit_bytes=vmem_limit,
            ),
            cost_estimate=cost,
            input_output_aliases=io_aliases,
        )(x_flat, score_col)
        return out.reshape(N, C, H, W)

    if fused_need <= budget:
        try:
            return _run_fused()
        except Exception:
            # The only exotic knob on this path is pl.Buffered(1) output
            # single-buffering; if a backend rejects it, fall back gracefully.
            if not (auto_buffers and out_buffers == 1):
                raise
    return _run_two_stage()


def channel_attention_ref(x, w1, b1, w2, b2):
    """Pure-JAX reference matching the PyTorch forward."""
    pooled = jnp.mean(x.astype(jnp.float32), axis=(2, 3))          # (N, C)
    h = _celu(pooled @ w1.astype(jnp.float32).T + b1.astype(jnp.float32))
    s = jax.nn.sigmoid(h @ w2.astype(jnp.float32).T + b2.astype(jnp.float32))
    return (x * s[:, :, None, None].astype(x.dtype)).astype(x.dtype)


if __name__ == "__main__":
    key = jax.random.PRNGKey(0)
    kx, kw1, kb1, kw2, kb2, kx2, kx3 = jax.random.split(key, 7)

    C, reduction = 64, 8          # small shapes consistent with the module
    Cmid = C // reduction
    w1 = jax.random.normal(kw1, (Cmid, C), dtype=jnp.float32) * 0.05
    b1 = jax.random.normal(kb1, (Cmid,), dtype=jnp.float32) * 0.05
    w2 = jax.random.normal(kw2, (C, Cmid), dtype=jnp.float32) * 0.05
    b2 = jax.random.normal(kb2, (C,), dtype=jnp.float32) * 0.05

    # 1) Fused path, Nb=1 (>= 2 grid steps keeps both v7x TCs busy).
    x = jax.random.normal(kx, (2, C, 16, 16), dtype=jnp.float32)
    out = jax.block_until_ready(channel_attention(x, w1, b1, w2, b2))
    ref = channel_attention_ref(x, w1, b1, w2, b2)
    assert out.shape == x.shape
    assert jnp.allclose(out, ref, atol=1e-5, rtol=1e-5), "fused(Nb=1) mismatch"

    # 2) Fused path with sample batching (Nb>1) for small per-sample blocks.
    xb = jax.random.normal(kx2, (8, C, 16, 16), dtype=jnp.float32)
    outb = jax.block_until_ready(channel_attention(xb, w1, b1, w2, b2))
    refb = channel_attention_ref(xb, w1, b1, w2, b2)
    assert jnp.allclose(outb, refb, atol=1e-5, rtol=1e-5), "fused(Nb>1) mismatch"

    # 3) Fused path with a ragged lane chunk (HW = 14*14 = 196, not /128).
    xr = jax.random.normal(kx3, (2, C, 14, 14), dtype=jnp.float32)
    outr = jax.block_until_ready(channel_attention(xr, w1, b1, w2, b2))
    refr = channel_attention_ref(xr, w1, b1, w2, b2)
    assert jnp.allclose(outr, refr, atol=1e-5, rtol=1e-5), "fused(ragged) mismatch"

    # 4) Two-stage fallback (tiny artificial VMEM budget) with ragged lane tile.
    outf = jax.block_until_ready(
        channel_attention(xr, w1, b1, w2, b2, vmem_budget_bytes=48 << 10))
    assert jnp.allclose(outf, refr, atol=1e-5, rtol=1e-5), "fallback mismatch"

    print("KERNEL_OK")
</pallas_src>

<mosaic_0001>
module attributes {stable_mosaic.version = 11 : i64} {
  func.func @kernel(%arg0: i32, %arg1: memref<1x64x256xf32, #tpu.memory_space<vmem>>, %arg2: memref<8x64xf32, #tpu.memory_space<vmem>>, %arg3: memref<8x1xf32, #tpu.memory_space<vmem>>, %arg4: memref<64x8xf32, #tpu.memory_space<vmem>>, %arg5: memref<64x1xf32, #tpu.memory_space<vmem>>, %arg6: memref<1x64x256xf32, #tpu.memory_space<vmem>>, %arg7: memref<64x1xf32, #tpu.memory_space<vmem>>) attributes {dimension_semantics = [#tpu.dimension_semantics<parallel>], iteration_bounds = array<i64: 2>, scalar_prefetch = 0 : i64, scratch_operands = 1 : i64, tpu.core_type = #tpu.core_type<tc>, window_params = [{transform_indices = @transform_0, window_bounds = array<i64: 1, 64, 256>}, {pipeline_mode = #tpu.pipeline_mode<synchronous>, transform_indices = @transform_1, window_bounds = array<i64: 8, 64>}, {pipeline_mode = #tpu.pipeline_mode<synchronous>, transform_indices = @transform_2, window_bounds = array<i64: 8, 1>}, {pipeline_mode = #tpu.pipeline_mode<synchronous>, transform_indices = @transform_3, window_bounds = array<i64: 64, 8>}, {pipeline_mode = #tpu.pipeline_mode<synchronous>, transform_indices = @transform_4, window_bounds = array<i64: 64, 1>}, {transform_indices = @transform_5, window_bounds = array<i64: 1, 64, 256>}]} {
    %cst = arith.constant 0.000000e+00 : f32
    %0 = vector.broadcast %cst : f32 to vector<64x1xf32>
    %c0_i32 = arith.constant 0 : i32
    %c256_i32 = arith.constant 256 : i32
    %1 = arith.muli %c0_i32, %c256_i32 : i32
    %2 = tpu.assume_multiple %1, 256 : i32
    %c0 = arith.constant 0 : index
    %c0_0 = arith.constant 0 : index
    %3 = arith.index_cast %2 : i32 to index
    %4 = vector.load %arg1[%c0, %c0_0, %3] : memref<1x64x256xf32, #tpu.memory_space<vmem>>, vector<1x64x256xf32>
    %5 = vector.shape_cast %4 : vector<1x64x256xf32> to vector<64x256xf32>
    %cst_1 = arith.constant dense<0.000000e+00> : vector<64xf32>
    %6 = vector.multi_reduction <add>, %5, %cst_1 [1] : vector<64x256xf32> to vector<64xf32>
    %7 = vector.shape_cast %6 : vector<64xf32> to vector<64x1xf32>
    %8 = arith.addf %0, %7 : vector<64x1xf32>
    %c1_i32 = arith.constant 1 : i32
    %cst_2 = arith.constant 3.906250e-03 : f32
    %9 = vector.broadcast %cst_2 : f32 to vector<64x1xf32>
    %10 = arith.mulf %8, %9 : vector<64x1xf32>
    %c0_3 = arith.constant 0 : index
    %c0_4 = arith.constant 0 : index
    %11 = vector.load %arg2[%c0_3, %c0_4] : memref<8x64xf32, #tpu.memory_space<vmem>>, vector<8x64xf32>
    %cst_5 = arith.constant dense<0.000000e+00> : vector<8x1xf32>
    %12 = tpu.matmul %11, %10, %cst_5 {dimension_numbers = #tpu.dot_dimension_numbers<[1], [0], [0], [1], [0, 0, 1, 1], [], []>} : vector<8x64xf32>, vector<64x1xf32>, vector<8x1xf32> -> vector<8x1xf32>
    %c0_6 = arith.constant 0 : index
    %c0_7 = arith.constant 0 : index
    %13 = vector.load %arg3[%c0_6, %c0_7] : memref<8x1xf32, #tpu.memory_space<vmem>>, vector<8x1xf32>
    %14 = arith.addf %12, %13 : vector<8x1xf32>
    %cst_8 = arith.constant 0.000000e+00 : f32
    %15 = vector.broadcast %cst_8 : f32 to vector<8x1xf32>
    %16 = arith.maximumf %14, %15 : vector<8x1xf32>
    %cst_9 = arith.constant 1.000000e+00 : f32
    %17 = vector.broadcast %cst_9 : f32 to vector<8x1xf32>
    %18 = arith.divf %14, %17 : vector<8x1xf32>
    %19 = math.exp %18 : vector<8x1xf32>
    %cst_10 = arith.constant 1.000000e+00 : f32
    %20 = vector.broadcast %cst_10 : f32 to vector<8x1xf32>
    %21 = arith.subf %19, %20 : vector<8x1xf32>
    %cst_11 = arith.constant 1.000000e+00 : f32
    %22 = vector.broadcast %cst_11 : f32 to vector<8x1xf32>
    %23 = arith.mulf %22, %21 : vector<8x1xf32>
    %cst_12 = arith.constant 0.000000e+00 : f32
    %24 = vector.broadcast %cst_12 : f32 to vector<8x1xf32>
    %25 = arith.minimumf %24, %23 : vector<8x1xf32>
    %26 = arith.addf %16, %25 : vector<8x1xf32>
    %c0_13 = arith.constant 0 : index
    %c0_14 = arith.constant 0 : index
    %27 = vector.load %arg4[%c0_13, %c0_14] : memref<64x8xf32, #tpu.memory_space<vmem>>, vector<64x8xf32>
    %cst_15 = arith.constant dense<0.000000e+00> : vector<64x1xf32>
    %28 = tpu.matmul %27, %26, %cst_15 {dimension_numbers = #tpu.dot_dimension_numbers<[1], [0], [0], [1], [0, 0, 1, 1], [], []>} : vector<64x8xf32>, vector<8x1xf32>, vector<64x1xf32> -> vector<64x1xf32>
    %c0_16 = arith.constant 0 : index
    %c0_17 = arith.constant 0 : index
    %29 = vector.load %arg5[%c0_16, %c0_17] : memref<64x1xf32, #tpu.memory_space<vmem>>, vector<64x1xf32>
    %30 = arith.addf %28, %29 : vector<64x1xf32>
    %31 = arith.negf %30 : vector<64x1xf32>
    %32 = math.exp %31 : vector<64x1xf32>
    %cst_18 = arith.constant 1.000000e+00 : f32
    %33 = vector.broadcast %cst_18 : f32 to vector<64x1xf32>
    %34 = arith.addf %33, %32 : vector<64x1xf32>
    %35 = arith.divf %33, %34 : vector<64x1xf32>
    %c0_19 = arith.constant 0 : index
    %c0_20 = arith.constant 0 : index
    %36 = vector.load %arg7[%c0_19, %c0_20] : memref<64x1xf32, #tpu.memory_space<vmem>>, vector<64x1xf32>
    tpu.vector_store %arg7[%c0_19, %c0_20], %35 {strides = array<i32>} : memref<64x1xf32, #tpu.memory_space<vmem>>, vector<64x1xf32>,
    %c0_21 = arith.constant 0 : index
    %c0_22 = arith.constant 0 : index
    %37 = vector.load %arg7[%c0_21, %c0_22] : memref<64x1xf32, #tpu.memory_space<vmem>>, vector<64x1xf32>
    %c0_i32_23 = arith.constant 0 : i32
    %c1_i32_24 = arith.constant 1 : i32
    %38 = arith.muli %c0_i32_23, %c1_i32_24 : i32
    %c0_i32_25 = arith.constant 0 : i32
    %39 = arith.addi %c0_i32_25, %38 : i32
    %c256_i32_26 = arith.constant 256 : i32
    %40 = arith.muli %39, %c256_i32_26 : i32
    %41 = tpu.assume_multiple %40, 256 : i32
    %c0_27 = arith.constant 0 : index
    %c0_28 = arith.constant 0 : index
    %42 = arith.index_cast %41 : i32 to index
    %43 = vector.load %arg1[%c0_27, %c0_28, %42] : memref<1x64x256xf32, #tpu.memory_space<vmem>>, vector<1x64x256xf32>
    %44 = vector.shape_cast %43 : vector<1x64x256xf32> to vector<64x256xf32>
    %45 = vector.broadcast %37 : vector<64x1xf32> to vector<64x256xf32>
    %46 = arith.mulf %44, %45 : vector<64x256xf32>
    %c0_29 = arith.constant 0 : index
    %c0_30 = arith.constant 0 : index
    %47 = arith.index_cast %41 : i32 to index
    %48 = vector.load %arg6[%c0_29, %c0_30, %47] : memref<1x64x256xf32, #tpu.memory_space<vmem>>, vector<1x64x256xf32>
    %49 = vector.shape_cast %48 : vector<1x64x256xf32> to vector<64x256xf32>
    %50 = vector.shape_cast %46 : vector<64x256xf32> to vector<1x64x256xf32>
    tpu.vector_store %arg6[%c0_29, %c0_30, %47], %50 {strides = array<i32>} : memref<1x64x256xf32, #tpu.memory_space<vmem>>, vector<1x64x256xf32>,
    %c1_i32_31 = arith.constant 1 : i32
    return
  }
  func.func @transform_0(%arg0: i32) -> (i32, i32, i32) {
    %c0_i32 = arith.constant 0 : i32
    %c0_i32_0 = arith.constant 0 : i32
    %c0_i32_1 = arith.constant 0 : i32
    return %arg0, %c0_i32, %c0_i32_0 : i32, i32, i32
  }
  func.func @transform_1(%arg0: i32) -> (i32, i32) {
    %c0_i32 = arith.constant 0 : i32
    %c0_i32_0 = arith.constant 0 : i32
    %c0_i32_1 = arith.constant 0 : i32
    return %c0_i32, %c0_i32_0 : i32, i32
  }
  func.func @transform_2(%arg0: i32) -> (i32, i32) {
    %c0_i32 = arith.constant 0 : i32
    %c0_i32_0 = arith.constant 0 : i32
    %c0_i32_1 = arith.constant 0 : i32
    return %c0_i32, %c0_i32_0 : i32, i32
  }
  func.func @transform_3(%arg0: i32) -> (i32, i32) {
    %c0_i32 = arith.constant 0 : i32
    %c0_i32_0 = arith.constant 0 : i32
    %c0_i32_1 = arith.constant 0 : i32
    return %c0_i32, %c0_i32_0 : i32, i32
  }
  func.func @transform_4(%arg0: i32) -> (i32, i32) {
    %c0_i32 = arith.constant 0 : i32
    %c0_i32_0 = arith.constant 0 : i32
    %c0_i32_1 = arith.constant 0 : i32
    return %c0_i32, %c0_i32_0 : i32, i32
  }
  func.func @transform_5(%arg0: i32) -> (i32, i32, i32) {
    %c0_i32 = arith.constant 0 : i32
    %c0_i32_0 = arith.constant 0 : i32
    %c0_i32_1 = arith.constant 0 : i32
    return %arg0, %c0_i32, %c0_i32_0 : i32, i32, i32
  }
}

</mosaic_0001>

<llo_original>
// kernel: tpu_custom_call.1
$region0: #{tpu_custom_call.1}
  #allocation0 [shape = 'u32[]', space=smem, size = 0x4, offset = 0x4, fixed_abs, tag = 'smem constant byte address 0x4 - core index']
  #allocation1 [shape = 'u32[72,128]{1,0:T(1,128)}', space=vmem, size = 0x9000, scoped, tag = 'internal scratch']
  #allocation2 [shape = 'f32[64,1]{1,0:T(8,128)}', space=vmem, size = 0x8000, scoped, tag = 'scratch operand']
  %s0 = inlined_call_operand.hbm [shape: f32[2,64,256], index: 0, kind: input, shape index: {}]
  %s1 = inlined_call_operand.vmem [shape: f32[8,64], index: 1, kind: input, shape index: {}]
  %s2 = inlined_call_operand.vmem [shape: f32[8,1], index: 2, kind: input, shape index: {}]
  %s3 = inlined_call_operand.vmem [shape: f32[64,8], index: 3, kind: input, shape index: {}]
  %s4 = inlined_call_operand.vmem [shape: f32[64,1], index: 4, kind: input, shape index: {}]
  %s5 = inlined_call_operand.hbm [shape: f32[2,64,256], index: 5, kind: output, shape index: {}]
  %s6 = sld [smem:[#allocation0]]
  $region57: #{tpu_custom_call.1} parent=0
    _
  %s8 = ssub.s32 1, %s6
  %s9 = scalar_select 0, %s8, %s6
  $region1: #{tpu_custom_call.1} parent=0
    #allocation3 [shape = 'u8[131072]{0}', space=vmem, size = 0x20000, scoped, tag = 'input window, operand 0']
    #allocation4 [shape = 's32[2]{0}', space=sflag, size = 0x8, scoped, tag = 'scoped memory for tpu_custom_call.1']
    #allocation5 [shape = 's32[2]{0}', space=sflag, size = 0x8, scoped, tag = 'scoped memory for tpu_custom_call.1']
    #allocation6 [shape = 'u8[131072]{0}', space=vmem, size = 0x20000, scoped, tag = 'output window, operand 0']
    %10 = vsyncpa [#allocation4], 0
    %s11 = scalar_lea.sflag [#allocation4], 1
    %12 = vsyncpa %s11, 0
    %13 = vsyncpa [#allocation5], 0
    %s14 = scalar_lea.sflag [#allocation5], 1
    %15 = vsyncpa %s14, 0
    loop: start=0, step=1, limit=4
    $region2: #{tpu_custom_call.1} parent=1 // loop_pre_header
      _
    $region3: #{tpu_custom_call.1} parent=1 // loop_header
      %s17 = sphi 0, %s21
      %p18 = scmp.ge.s32.totalorder %s17, 4
      %s27 = sphi 0, %s29
      %s30 = sphi 0, %s27
      %s31 = sphi 0, %s30
      %s47 = sphi 0, %s31
      %s51 = sphi 0, %s51
      %s53 = sphi 0, %s51
      %s54 = sphi 0, %s53
      %s68 = sphi 0, %s54
      %s72 = sphi 0, %s72
      %s74 = sphi 0, %s72
      %s75 = sphi 0, %s74
      %s89 = sphi 0, %s75
      %s93 = sphi 0, %s93
      %s95 = sphi 0, %s93
      %s96 = sphi 0, %s95
      %s110 = sphi 0, %s96
      %s114 = sphi 0, %s114
      %s116 = sphi 0, %s114
      %s117 = sphi 0, %s116
      %s131 = sphi 0, %s117
      %s137 = sphi 0, %s139
      %s140 = sphi 0, %s137
      %s141 = sphi 0, %s140
      %s157 = sphi 0, %s141
    $region4: #{tpu_custom_call.1} parent=1 // loop_header_branch
      %20 = sbr.rel (%p18) target = $region8
    $region5: #{tpu_custom_call.1} parent=1 // loop_body
      %s22 = ssub.s32 %s17, 1
      %s23 = ssub.s32 %s17, 2
      %s24 = sadd.s32 %s17, 1
      %s25 = ssub.s32 %s17, %s24
      %p26 = scmp.eq.s32.totalorder %s25, 0
      %s28 = sadd.s32 %s27, 1
      %s29 = scalar_select %p26, %s27, %s28
      %p32 = pneg %p26
      %p33 = scmp.eq.s32.totalorder %s17, 1
      %p34 = por %p32, %p33
      %p35 = scmp.ne.s32.totalorder %s27, %s30
      %p36 = scmp.eq.s32.totalorder %s17, 0
      %p37 = por %p35, %p36
      %p38 = scmp.ne.s32.totalorder %s27, %s30
      %p39 = scmp.eq.s32.totalorder %s22, 1
      %p40 = por %p38, %p39
      %p41 = scmp.ne.s32.totalorder %s30, %s31
      %p42 = scmp.eq.s32.totalorder %s22, 0
      %p43 = por %p41, %p42
      %p44 = scmp.ne.s32.totalorder %s30, %s31
      %p45 = scmp.eq.s32.totalorder %s23, 1
      %p46 = por %p44, %p45
      %p48 = scmp.ne.s32.totalorder %s31, %s47
      %p49 = scmp.eq.s32.totalorder %s23, 0
      %p50 = por %p48, %p49
      %s52 = sadd.s32 %s51, 1
      %p55 = scmp.eq.s32.totalorder %s17, 1
      %p56 = scmp.ne.s32.totalorder %s51, %s53
      %p57 = scmp.eq.s32.totalorder %s17, 0
      %p58 = por %p56, %p57
      %p59 = scmp.ne.s32.totalorder %s51, %s53
      %p60 = scmp.eq.s32.totalorder %s22, 1
      %p61 = por %p59, %p60
      %p62 = scmp.ne.s32.totalorder %s53, %s54
      %p63 = scmp.eq.s32.totalorder %s22, 0
      %p64 = por %p62, %p63
      %p65 = scmp.ne.s32.totalorder %s53, %s54
      %p66 = scmp.eq.s32.totalorder %s23, 1
      %p67 = por %p65, %p66
      %p69 = scmp.ne.s32.totalorder %s54, %s68
      %p70 = scmp.eq.s32.totalorder %s23, 0
      %p71 = por %p69, %p70
      %s73 = sadd.s32 %s72, 1
      %p76 = scmp.eq.s32.totalorder %s17, 1
      %p77 = scmp.ne.s32.totalorder %s72, %s74
      %p78 = scmp.eq.s32.totalorder %s17, 0
      %p79 = por %p77, %p78
      %p80 = scmp.ne.s32.totalorder %s72, %s74
      %p81 = scmp.eq.s32.totalorder %s22, 1
      %p82 = por %p80, %p81
      %p83 = scmp.ne.s32.totalorder %s74, %s75
      %p84 = scmp.eq.s32.totalorder %s22, 0
      %p85 = por %p83, %p84
      %p86 = scmp.ne.s32.totalorder %s74, %s75
      %p87 = scmp.eq.s32.totalorder %s23, 1
      %p88 = por %p86, %p87
      %p90 = scmp.ne.s32.totalorder %s75, %s89
      %p91 = scmp.eq.s32.totalorder %s23, 0
      %p92 = por %p90, %p91
      %s94 = sadd.s32 %s93, 1
      %p97 = scmp.eq.s32.totalorder %s17, 1
      %p98 = scmp.ne.s32.totalorder %s93, %s95
      %p99 = scmp.eq.s32.totalorder %s17, 0
      %p100 = por %p98, %p99
      %p101 = scmp.ne.s32.totalorder %s93, %s95
      %p102 = scmp.eq.s32.totalorder %s22, 1
      %p103 = por %p101, %p102
      %p104 = scmp.ne.s32.totalorder %s95, %s96
      %p105 = scmp.eq.s32.totalorder %s22, 0
      %p106 = por %p104, %p105
      %p107 = scmp.ne.s32.totalorder %s95, %s96
      %p108 = scmp.eq.s32.totalorder %s23, 1
      %p109 = por %p107, %p108
      %p111 = scmp.ne.s32.totalorder %s96, %s110
      %p112 = scmp.eq.s32.totalorder %s23, 0
      %p113 = por %p111, %p112
      %s115 = sadd.s32 %s114, 1
      %p118 = scmp.eq.s32.totalorder %s17, 1
      %p119 = scmp.ne.s32.totalorder %s114, %s116
      %p120 = scmp.eq.s32.totalorder %s17, 0
      %p121 = por %p119, %p120
      %p122 = scmp.ne.s32.totalorder %s114, %s116
      %p123 = scmp.eq.s32.totalorder %s22, 1
      %p124 = por %p122, %p123
      %p125 = scmp.ne.s32.totalorder %s116, %s117
      %p126 = scmp.eq.s32.totalorder %s22, 0
      %p127 = por %p125, %p126
      %p128 = scmp.ne.s32.totalorder %s116, %s117
      %p129 = scmp.eq.s32.totalorder %s23, 1
      %p130 = por %p128, %p129
      %p132 = scmp.ne.s32.totalorder %s117, %s131
      %p133 = scmp.eq.s32.totalorder %s23, 0
      %p134 = por %p132, %p133
      %s135 = ssub.s32 %s17, %s24
      %p136 = scmp.eq.s32.totalorder %s135, 0
      %s138 = sadd.s32 %s137, 1
      %s139 = scalar_select %p136, %s137, %s138
      %p142 = pneg %p136
      %p143 = scmp.eq.s32.totalorder %s17, 1
      %p144 = por %p142, %p143
      %p145 = scmp.ne.s32.totalorder %s137, %s140
      %p146 = scmp.eq.s32.totalorder %s17, 0
      %p147 = por %p145, %p146
      %p148 = scmp.ne.s32.totalorder %s137, %s140
      %p149 = scmp.eq.s32.totalorder %s22, 1
      %p150 = por %p148, %p149
      %p151 = scmp.ne.s32.totalorder %s140, %s141
      %p152 = scmp.eq.s32.totalorder %s22, 0
      %p153 = por %p151, %p152
      %p154 = scmp.ne.s32.totalorder %s140, %s141
      %p155 = scmp.eq.s32.totalorder %s23, 1
      %p156 = por %p154, %p155
      %p158 = scmp.ne.s32.totalorder %s141, %s157
      %p159 = scmp.eq.s32.totalorder %s23, 0
      %p160 = por %p158, %p159
      %p161 = scmp.le.s32.totalorder 1, %s17
      %p162 = scmp.lt.s32.totalorder %s17, 3
      %p163 = pnand %p161, %p162
      %p164 = pneg %p163
      // Predicated region
      $region9: #{tpu_custom_call.1} parent=5 // pred_check
        _
      $region10: #{tpu_custom_call.1} parent=5 // pred_check_branch
        %166 = sbr.rel (%p163) target = $region12
      $region11: #{tpu_custom_call.1} parent=5 // pred_region
        %s167 = ssub.s32 %s17, 1
        // Predicated region
        $region13: #{tpu_custom_call.1} parent=11 // pred_check
          %p168 = pneg %p64
        $region14: #{tpu_custom_call.1} parent=11 // pred_check_branch
          %170 = sbr.rel (%p168) target = $region16
        $region15: #{tpu_custom_call.1} parent=11 // pred_region
          _
        $region16: #{tpu_custom_call.1} parent=11 // pred_fallthru
          _
        // Predicated region
        $region17: #{tpu_custom_call.1} parent=11 // pred_check
          %p171 = pneg %p85
        $region18: #{tpu_custom_call.1} parent=11 // pred_check_branch
          %173 = sbr.rel (%p171) target = $region20
        $region19: #{tpu_custom_call.1} parent=11 // pred_region
          _
        $region20: #{tpu_custom_call.1} parent=11 // pred_fallthru
          _
        // Predicated region
        $region21: #{tpu_custom_call.1} parent=11 // pred_check
          %p174 = pneg %p106
        $region22: #{tpu_custom_call.1} parent=11 // pred_check_branch
          %176 = sbr.rel (%p174) target = $region24
        $region23: #{tpu_custom_call.1} parent=11 // pred_region
          _
        $region24: #{tpu_custom_call.1} parent=11 // pred_fallthru
          _
        // Predicated region
        $region25: #{tpu_custom_call.1} parent=11 // pred_check
          %p177 = pneg %p127
        $region26: #{tpu_custom_call.1} parent=11 // pred_check_branch
          %179 = sbr.rel (%p177) target = $region28
        $region27: #{tpu_custom_call.1} parent=11 // pred_region
          _
        $region28: #{tpu_custom_call.1} parent=11 // pred_fallthru
          _
      $region12: #{tpu_custom_call.1} parent=5 // pred_fallthru
        _
      %p180 = scmp.lt.s32.totalorder %s17, 2
      // Predicated region
      $region29: #{tpu_custom_call.1} parent=5 // pred_check
        %p181 = pneg %p180
      $region30: #{tpu_custom_call.1} parent=5 // pred_check_branch
        %183 = sbr.rel (%p181) target = $region32
      $region31: #{tpu_custom_call.1} parent=5 // pred_region
        // Predicated region
        $region33: #{tpu_custom_call.1} parent=31 // pred_check
          %p184 = pneg %p37
        $region34: #{tpu_custom_call.1} parent=31 // pred_check_branch
          %186 = sbr.rel (%p184) target = $region36
        $region35: #{tpu_custom_call.1} parent=31 // pred_region
          %s187 = sand.u32 %s27, 1
          %s188 = scalar_lea.sflag [#allocation4], %s187
          %s189 = sand.u32 %s27, 1
          %s190 = smul.addr %s189, 128
          %s191 = scalar_lea.vmem [#allocation3], %s190
          %193 = vsyncadd %s188, 0
          %s194 = smul.addr %s17, 16
          %s195 = smul.addr %s194, 8
          %s196 = scalar_lea.hbm %s0, %s195
          %s197 = sshll.u32 %s196, 4
          %s198 = int_to_ptr.hbm [resolvable:$true] %s197
          %s199 = sshll.u32 %s191, 4
          %s200 = int_to_ptr.vmem [resolvable:$true] %s199
          %205 = dma.hbm_to_vmem [thread:$0]  %s198, 2048, %s200, %s188, 256, 256, 16
        $region36: #{tpu_custom_call.1} parent=31 // pred_fallthru
          _
      $region32: #{tpu_custom_call.1} parent=5 // pred_fallthru
        _
      %p206 = scmp.le.s32.totalorder 1, %s17
      %p207 = scmp.lt.s32.totalorder %s17, 3
      %p208 = pnand %p206, %p207
      %p209 = pneg %p208
      // Predicated region
      $region37: #{tpu_custom_call.1} parent=5 // pred_check
        _
      $region38: #{tpu_custom_call.1} parent=5 // pred_check_branch
        %211 = sbr.rel (%p208) target = $region40
      $region39: #{tpu_custom_call.1} parent=5 // pred_region
        %s212 = ssub.s32 %s17, 1
        %s213 = sand.u32 %s30, 1
        %s214 = scalar_lea.sflag [#allocation4], %s213
        %s215 = sand.u32 %s30, 1
        %s216 = smul.addr %s215, 128
        %s217 = scalar_lea.vmem [#allocation3], %s216
        // Predicated region
        $region41: #{tpu_custom_call.1} parent=39 // pred_check
          %p218 = pneg %p43
        $region42: #{tpu_custom_call.1} parent=39 // pred_check_branch
          %220 = sbr.rel (%p218) target = $region44
        $region43: #{tpu_custom_call.1} parent=39 // pred_region
          %222 = dma.done %s214, 2048
        $region44: #{tpu_custom_call.1} parent=39 // pred_fallthru
          _
        %s223 = sand.u32 %s30, 1
        %s224 = scalar_lea.sflag [#allocation4], %s223
        %s225 = sand.u32 %s30, 1
        %s226 = smul.addr %s225, 128
        %s227 = scalar_lea.vmem [#allocation3], %s226
        %p228 = pneg %p43
        %p229 = pneg %p40
        %p230 = pneg %p64
        %p231 = pneg %p61
        %p232 = pneg %p85
        %p233 = pneg %p82
        %p234 = pneg %p106
        %p235 = pneg %p103
        %p236 = pneg %p127
        %p237 = pneg %p124
        %p238 = pneg %p153
        %p239 = pneg %p150
        %s240 = sand.u32 %s140, 1
        %s241 = scalar_lea.sflag [#allocation5], %s240
        %s242 = sand.u32 %s140, 1
        %s243 = smul.addr %s242, 128
        %s244 = scalar_lea.vmem [#allocation6], %s243
        %v245 = vld [vmem:[%s217] sm:$0xff]
        %v246 = vld [vmem:[%s217 + $0x8] sm:$0xff]
        %v247 = vld [vmem:[%s217 + $0x10] sm:$0xff]
        %v248 = vld [vmem:[%s217 + $0x18] sm:$0xff]
        %v249 = vld [vmem:[%s217 + $0x20] sm:$0xff]
        %v250 = vld [vmem:[%s217 + $0x28] sm:$0xff]
        %v251 = vld [vmem:[%s217 + $0x30] sm:$0xff]
        %v252 = vld [vmem:[%s217 + $0x38] sm:$0xff]
        %v253 = vld [vmem:[%s217 + $0x40] sm:$0xff]
        %v254 = vld [vmem:[%s217 + $0x48] sm:$0xff]
        %v255 = vld [vmem:[%s217 + $0x50] sm:$0xff]
        %v256 = vld [vmem:[%s217 + $0x58] sm:$0xff]
        %v257 = vld [vmem:[%s217 + $0x60] sm:$0xff]
        %v258 = vld [vmem:[%s217 + $0x68] sm:$0xff]
        %v259 = vld [vmem:[%s217 + $0x70] sm:$0xff]
        %v260 = vld [vmem:[%s217 + $0x78] sm:$0xff]
        %v261 = vadd.f32 %v245, %v246
        %262 = vadd.xlane.f32.xlu0 %v261
        %v263 = vpop.xlane.xlu0 %262
        %v264 = vadd.f32 %v247, %v248
        %265 = vadd.xlane.f32.xlu0 %v264
        %v266 = vpop.xlane.xlu0 %265
        %v267 = vadd.f32 %v249, %v250
        %268 = vadd.xlane.f32.xlu0 %v267
        %v269 = vpop.xlane.xlu0 %268
        %v270 = vadd.f32 %v251, %v252
        %271 = vadd.xlane.f32.xlu0 %v270
        %v272 = vpop.xlane.xlu0 %271
        %v273 = vadd.f32 %v253, %v254
        %274 = vadd.xlane.f32.xlu0 %v273
        %v275 = vpop.xlane.xlu0 %274
        %v276 = vadd.f32 %v255, %v256
        %277 = vadd.xlane.f32.xlu0 %v276
        %v278 = vpop.xlane.xlu0 %277
        %v279 = vadd.f32 %v257, %v258
        %280 = vadd.xlane.f32.xlu0 %v279
        %v281 = vpop.xlane.xlu0 %280
        %v282 = vadd.f32 %v259, %v260
        %283 = vadd.xlane.f32.xlu0 %v282
        %v284 = vpop.xlane.xlu0 %283
        %v285 = vadd.f32 %v263, 0.0
        %v286 = vadd.f32 %v266, 0.0
        %v287 = vadd.f32 %v269, 0.0
        %v288 = vadd.f32 %v272, 0.0
        %v289 = vadd.f32 %v275, 0.0
        %v290 = vadd.f32 %v278, 0.0
        %v291 = vadd.f32 %v281, 0.0
        %v292 = vadd.f32 %v284, 0.0
        %v293 = vmul.f32 %v285, 0.00390625
        %v294 = vmul.f32 %v286, 0.00390625
        %v295 = vmul.f32 %v287, 0.00390625
        %v296 = vmul.f32 %v288, 0.00390625
        %v297 = vmul.f32 %v289, 0.00390625
        %v298 = vmul.f32 %v290, 0.00390625
        %v299 = vmul.f32 %v291, 0.00390625
        %v300 = vmul.f32 %v292, 0.00390625
        %v301 = vld [vmem:[%s1] sm:$0xff]
        %v302 = vld [vmem:[%s2] sm:$0xff]
        %vm303 = vcmask 523264
        %v305 = vsel %vm303, %v301, 0
        %307 = vmatpush.msra.mxu0 0.0
        %308 = vmatpush.msra.mxu0 0.0
        %309 = vmatpush.msra.mxu0 0.0
        %310 = vmatpush.msra.mxu0 0.0
        %311 = vmatpush.msra.mxu0 0.0
        %312 = vmatpush.msra.mxu0 0.0
        %313 = vmatpush.msra.mxu0 0.0
        %314 = vmatpush.msra.mxu0 0.0
        %315 = vmatpush.msra.mxu0 %v300
        %316 = vmatpush.msra.mxu0 %v299
        %317 = vmatpush.msra.mxu0 %v298
        %318 = vmatpush.msra.mxu0 %v297
        %319 = vmatpush.msra.mxu0 %v296
        %320 = vmatpush.msra.mxu0 %v295
        %321 = vmatpush.msra.mxu0 %v294
        %322 = vmatpush.msra.mxu0 %v293
        %323 = vmatmul.f32.gmra.mxu0 %v305
        %v324 = vpop.f32.mrf.mxu0
        %v325 = vadd.f32 %v302, %v324
        %326 = vdwg.mxu0
        %v327 = vmax.f32 %v325, 0.0
        %v328 = vmul.f32 %v325, 1.442695
        %v329 = vpow.pop %v328
        %v330 = vsub.f32 %v329, 1.0
        %v331 = vmin.f32 %v330, 0.0
        %v332 = vadd.f32 %v327, %v331
        %v333 = vld [vmem:[%s3] sm:$0xff]
        %v334 = vld [vmem:[%s3 + $0x8] sm:$0xff]
        %v335 = vld [vmem:[%s3 + $0x10] sm:$0xff]
        %v336 = vld [vmem:[%s3 + $0x18] sm:$0xff]
        %v337 = vld [vmem:[%s3 + $0x20] sm:$0xff]
        %v338 = vld [vmem:[%s3 + $0x28] sm:$0xff]
        %v339 = vld [vmem:[%s3 + $0x30] sm:$0xff]
        %v340 = vld [vmem:[%s3 + $0x38] sm:$0xff]
        %v341 = vld [vmem:[%s4] sm:$0xff]
        %v342 = vld [vmem:[%s4 + $0x8] sm:$0xff]
        %v343 = vld [vmem:[%s4 + $0x10] sm:$0xff]
        %v344 = vld [vmem:[%s4 + $0x18] sm:$0xff]
        %v345 = vld [vmem:[%s4 + $0x20] sm:$0xff]
        %v346 = vld [vmem:[%s4 + $0x28] sm:$0xff]
        %v347 = vld [vmem:[%s4 + $0x30] sm:$0xff]
        %v348 = vld [vmem:[%s4 + $0x38] sm:$0xff]
        %vm349 = vcmask 64512
        %v351 = vsel %vm349, %v333, 0
        %v354 = vsel %vm349, %v334, 0
        %v357 = vsel %vm349, %v335, 0
        %v360 = vsel %vm349, %v336, 0
        %v363 = vsel %vm349, %v337, 0
        %v366 = vsel %vm349, %v338, 0
        %v369 = vsel %vm349, %v339, 0
        %v372 = vsel %vm349, %v340, 0
        %374 = vmatpush.msra.mxu0 0.0
        %375 = vmatpush.msra.mxu0 0.0
        %376 = vmatpush.msra.mxu0 0.0
        %377 = vmatpush.msra.mxu0 0.0
        %378 = vmatpush.msra.mxu0 0.0
        %379 = vmatpush.msra.mxu0 0.0
        %380 = vmatpush.msra.mxu0 0.0
        %381 = vmatpush.msra.mxu0 0.0
        %382 = vmatpush.msra.mxu0 0.0
        %383 = vmatpush.msra.mxu0 0.0
        %384 = vmatpush.msra.mxu0 0.0
        %385 = vmatpush.msra.mxu0 0.0
        %386 = vmatpush.msra.mxu0 0.0
        %387 = vmatpush.msra.mxu0 0.0
        %388 = vmatpush.msra.mxu0 0.0
        %389 = vmatpush.msra.mxu0 %v332
        %390 = vmatmul.f32.gmra.mxu0 %v351
        %v391 = vpop.f32.mrf.mxu0
        %v392 = vadd.f32 %v341, %v391
        %393 = vmatmul.f32.gmra.mxu0 %v354
        %v394 = vpop.f32.mrf.mxu0
        %v395 = vadd.f32 %v342, %v394
        %396 = vmatmul.f32.gmra.mxu0 %v357
        %v397 = vpop.f32.mrf.mxu0
        %v398 = vadd.f32 %v343, %v397
        %399 = vmatmul.f32.gmra.mxu0 %v360
        %v400 = vpop.f32.mrf.mxu0
        %v401 = vadd.f32 %v344, %v400
        %402 = vmatmul.f32.gmra.mxu0 %v363
        %v403 = vpop.f32.mrf.mxu0
        %v404 = vadd.f32 %v345, %v403
        %405 = vmatmul.f32.gmra.mxu0 %v366
        %v406 = vpop.f32.mrf.mxu0
        %v407 = vadd.f32 %v346, %v406
        %408 = vmatmul.f32.gmra.mxu0 %v369
        %v409 = vpop.f32.mrf.mxu0
        %v410 = vadd.f32 %v347, %v409
        %411 = vmatmul.f32.gmra.mxu0 %v372
        %v412 = vpop.f32.mrf.mxu0
        %v413 = vadd.f32 %v348, %v412
        %414 = vdwg.mxu0
        %v415 = vxor.u32 %v392, 2147483648
        %v416 = vxor.u32 %v395, 2147483648
        %v417 = vxor.u32 %v398, 2147483648
        %v418 = vxor.u32 %v401, 2147483648
        %v419 = vxor.u32 %v404, 2147483648
        %v420 = vxor.u32 %v407, 2147483648
        %v421 = vxor.u32 %v410, 2147483648
        %v422 = vxor.u32 %v413, 2147483648
        %v423 = vmul.f32 %v415, 1.442695
        %v424 = vpow.pop %v423
        %v425 = vmul.f32 %v416, 1.442695
        %v426 = vpow.pop %v425
        %v427 = vmul.f32 %v417, 1.442695
        %v428 = vpow.pop %v427
        %v429 = vmul.f32 %v418, 1.442695
        %v430 = vpow.pop %v429
        %v431 = vmul.f32 %v419, 1.442695
        %v432 = vpow.pop %v431
        %v433 = vmul.f32 %v420, 1.442695
        %v434 = vpow.pop %v433
        %v435 = vmul.f32 %v421, 1.442695
        %v436 = vpow.pop %v435
        %v437 = vmul.f32 %v422, 1.442695
        %v438 = vpow.pop %v437
        %v439 = vadd.f32 %v424, 1.0
        %v440 = vadd.f32 %v426, 1.0
        %v441 = vadd.f32 %v428, 1.0
        %v442 = vadd.f32 %v430, 1.0
        %v443 = vadd.f32 %v432, 1.0
        %v444 = vadd.f32 %v434, 1.0
        %v445 = vadd.f32 %v436, 1.0
        %v446 = vadd.f32 %v438, 1.0
        %v447 = vrcp.pop %v439
        %v448 = vmul.f32 %v439, %v447
        %v449 = vsub.f32 1.0, %v448
        %v450 = vmul.f32 %v447, %v449
        %v451 = vadd.f32 %v447, %v450
        %vm452 = vweird.f32 %v439
        %vm453 = vweird.f32 %v447
        %vm454 = vmor %vm452, %vm453
        %v455 = vsel %vm454, %v447, %v451
        %v456 = vand.u32 2147483647, %v439
        %vm457 = vcmp.eq.f32.partialorder %v456, 8.507059e+37
        %v458 = vand.u32 %v439, 2147483648
        %v459 = vor.u32 1.1754944e-38, %v458
        %v460 = vsel %vm457, %v459, %v455
        %v461 = vmul.f32 1.0, %v460
        %v462 = vrcp.pop %v440
        %v463 = vmul.f32 %v440, %v462
        %v464 = vsub.f32 1.0, %v463
        %v465 = vmul.f32 %v462, %v464
        %v466 = vadd.f32 %v462, %v465
        %vm467 = vweird.f32 %v440
        %vm468 = vweird.f32 %v462
        %vm469 = vmor %vm467, %vm468
        %v470 = vsel %vm469, %v462, %v466
        %v471 = vand.u32 2147483647, %v440
        %vm472 = vcmp.eq.f32.partialorder %v471, 8.507059e+37
        %v473 = vand.u32 %v440, 2147483648
        %v474 = vor.u32 1.1754944e-38, %v473
        %v475 = vsel %vm472, %v474, %v470
        %v476 = vmul.f32 1.0, %v475
        %v477 = vrcp.pop %v441
        %v478 = vmul.f32 %v441, %v477
        %v479 = vsub.f32 1.0, %v478
        %v480 = vmul.f32 %v477, %v479
        %v481 = vadd.f32 %v477, %v480
        %vm482 = vweird.f32 %v441
        %vm483 = vweird.f32 %v477
        %vm484 = vmor %vm482, %vm483
        %v485 = vsel %vm484, %v477, %v481
        %v486 = vand.u32 2147483647, %v441
        %vm487 = vcmp.eq.f32.partialorder %v486, 8.507059e+37
        %v488 = vand.u32 %v441, 2147483648
        %v489 = vor.u32 1.1754944e-38, %v488
        %v490 = vsel %vm487, %v489, %v485
        %v491 = vmul.f32 1.0, %v490
        %v492 = vrcp.pop %v442
        %v493 = vmul.f32 %v442, %v492
        %v494 = vsub.f32 1.0, %v493
        %v495 = vmul.f32 %v492, %v494
        %v496 = vadd.f32 %v492, %v495
        %vm497 = vweird.f32 %v442
        %vm498 = vweird.f32 %v492
        %vm499 = vmor %vm497, %vm498
        %v500 = vsel %vm499, %v492, %v496
        %v501 = vand.u32 2147483647, %v442
        %vm502 = vcmp.eq.f32.partialorder %v501, 8.507059e+37
        %v503 = vand.u32 %v442, 2147483648
        %v504 = vor.u32 1.1754944e-38, %v503
        %v505 = vsel %vm502, %v504, %v500
        %v506 = vmul.f32 1.0, %v505
        %v507 = vrcp.pop %v443
        %v508 = vmul.f32 %v443, %v507
        %v509 = vsub.f32 1.0, %v508
        %v510 = vmul.f32 %v507, %v509
        %v511 = vadd.f32 %v507, %v510
        %vm512 = vweird.f32 %v443
        %vm513 = vweird.f32 %v507
        %vm514 = vmor %vm512, %vm513
        %v515 = vsel %vm514, %v507, %v511
        %v516 = vand.u32 2147483647, %v443
        %vm517 = vcmp.eq.f32.partialorder %v516, 8.507059e+37
        %v518 = vand.u32 %v443, 2147483648
        %v519 = vor.u32 1.1754944e-38, %v518
        %v520 = vsel %vm517, %v519, %v515
        %v521 = vmul.f32 1.0, %v520
        %v522 = vrcp.pop %v444
        %v523 = vmul.f32 %v444, %v522
        %v524 = vsub.f32 1.0, %v523
        %v525 = vmul.f32 %v522, %v524
        %v526 = vadd.f32 %v522, %v525
        %vm527 = vweird.f32 %v444
        %vm528 = vweird.f32 %v522
        %vm529 = vmor %vm527, %vm528
        %v530 = vsel %vm529, %v522, %v526
        %v531 = vand.u32 2147483647, %v444
        %vm532 = vcmp.eq.f32.partialorder %v531, 8.507059e+37
        %v533 = vand.u32 %v444, 2147483648
        %v534 = vor.u32 1.1754944e-38, %v533
        %v535 = vsel %vm532, %v534, %v530
        %v536 = vmul.f32 1.0, %v535
        %v537 = vrcp.pop %v445
        %v538 = vmul.f32 %v445, %v537
        %v539 = vsub.f32 1.0, %v538
        %v540 = vmul.f32 %v537, %v539
        %v541 = vadd.f32 %v537, %v540
        %vm542 = vweird.f32 %v445
        %vm543 = vweird.f32 %v537
        %vm544 = vmor %vm542, %vm543
        %v545 = vsel %vm544, %v537, %v541
        %v546 = vand.u32 2147483647, %v445
        %vm547 = vcmp.eq.f32.partialorder %v546, 8.507059e+37
        %v548 = vand.u32 %v445, 2147483648
        %v549 = vor.u32 1.1754944e-38, %v548
        %v550 = vsel %vm547, %v549, %v545
        %v551 = vmul.f32 1.0, %v550
        %v552 = vrcp.pop %v446
        %v553 = vmul.f32 %v446, %v552
        %v554 = vsub.f32 1.0, %v553
        %v555 = vmul.f32 %v552, %v554
        %v556 = vadd.f32 %v552, %v555
        %vm557 = vweird.f32 %v446
        %vm558 = vweird.f32 %v552
        %vm559 = vmor %vm557, %vm558
        %v560 = vsel %vm559, %v552, %v556
        %v561 = vand.u32 2147483647, %v446
        %vm562 = vcmp.eq.f32.partialorder %v561, 8.507059e+37
        %v563 = vand.u32 %v446, 2147483648
        %v564 = vor.u32 1.1754944e-38, %v563
        %v565 = vsel %vm562, %v564, %v560
        %v566 = vmul.f32 1.0, %v565
        %vm567 = vcmask 7168
        %568 = vst.msk [vmem:[#allocation2] sm:$0xff] %vm567, %v461
        %569 = vst.msk [vmem:[#allocation2 + $0x8] sm:$0xff] %vm567, %v476
        %570 = vst.msk [vmem:[#allocation2 + $0x10] sm:$0xff] %vm567, %v491
        %571 = vst.msk [vmem:[#allocation2 + $0x18] sm:$0xff] %vm567, %v506
        %572 = vst.msk [vmem:[#allocation2 + $0x20] sm:$0xff] %vm567, %v521
        %573 = vst.msk [vmem:[#allocation2 + $0x28] sm:$0xff] %vm567, %v536
        %574 = vst.msk [vmem:[#allocation2 + $0x30] sm:$0xff] %vm567, %v551
        %575 = vst.msk [vmem:[#allocation2 + $0x38] sm:$0xff] %vm567, %v566
        %v576 = vld [vmem:[#allocation2] sm:$0xff]
        %v577 = vld [vmem:[#allocation2 + $0x8] sm:$0xff]
        %v578 = vld [vmem:[#allocation2 + $0x10] sm:$0xff]
        %v579 = vld [vmem:[#allocation2 + $0x18] sm:$0xff]
        %v580 = vld [vmem:[#allocation2 + $0x20] sm:$0xff]
        %v581 = vld [vmem:[#allocation2 + $0x28] sm:$0xff]
        %v582 = vld [vmem:[#allocation2 + $0x30] sm:$0xff]
        %v583 = vld [vmem:[#allocation2 + $0x38] sm:$0xff]
        %v584 = vld [vmem:[%s217] sm:$0xff]
        %v585 = vld [vmem:[%s217 + $0x8] sm:$0xff]
        %v586 = vld [vmem:[%s217 + $0x10] sm:$0xff]
        %v587 = vld [vmem:[%s217 + $0x18] sm:$0xff]
        %v588 = vld [vmem:[%s217 + $0x20] sm:$0xff]
        %v589 = vld [vmem:[%s217 + $0x28] sm:$0xff]
        %v590 = vld [vmem:[%s217 + $0x30] sm:$0xff]
        %v591 = vld [vmem:[%s217 + $0x38] sm:$0xff]
        %v592 = vld [vmem:[%s217 + $0x40] sm:$0xff]
        %v593 = vld [vmem:[%s217 + $0x48] sm:$0xff]
        %v594 = vld [vmem:[%s217 + $0x50] sm:$0xff]
        %v595 = vld [vmem:[%s217 + $0x58] sm:$0xff]
        %v596 = vld [vmem:[%s217 + $0x60] sm:$0xff]
        %v597 = vld [vmem:[%s217 + $0x68] sm:$0xff]
        %v598 = vld [vmem:[%s217 + $0x70] sm:$0xff]
        %v599 = vld [vmem:[%s217 + $0x78] sm:$0xff]
        %601 = vset.pattern.permute.xlu0 0
        %602 = vperm.xlu0 %601, %v576
        %v603 = vpop.permute.xlu0 %602
        %606 = vset.pattern.permute.xlu0 0
        %607 = vperm.xlu0 %606, %v577
        %v608 = vpop.permute.xlu0 %607
        %611 = vset.pattern.permute.xlu0 0
        %612 = vperm.xlu0 %611, %v578
        %v613 = vpop.permute.xlu0 %612
        %616 = vset.pattern.permute.xlu0 0
        %617 = vperm.xlu0 %616, %v579
        %v618 = vpop.permute.xlu0 %617
        %621 = vset.pattern.permute.xlu0 0
        %622 = vperm.xlu0 %621, %v580
        %v623 = vpop.permute.xlu0 %622
        %626 = vset.pattern.permute.xlu0 0
        %627 = vperm.xlu0 %626, %v581
        %v628 = vpop.permute.xlu0 %627
        %631 = vset.pattern.permute.xlu0 0
        %632 = vperm.xlu0 %631, %v582
        %v633 = vpop.permute.xlu0 %632
        %636 = vset.pattern.permute.xlu0 0
        %637 = vperm.xlu0 %636, %v583
        %v638 = vpop.permute.xlu0 %637
        %v640 = vmul.f32 %v584, %v603
        %v641 = vmul.f32 %v585, %v603
        %v642 = vmul.f32 %v586, %v608
        %v643 = vmul.f32 %v587, %v608
        %v644 = vmul.f32 %v588, %v613
        %v645 = vmul.f32 %v589, %v613
        %v646 = vmul.f32 %v590, %v618
        %v647 = vmul.f32 %v591, %v618
        %v648 = vmul.f32 %v592, %v623
        %v649 = vmul.f32 %v593, %v623
        %v650 = vmul.f32 %v594, %v628
        %v651 = vmul.f32 %v595, %v628
        %v652 = vmul.f32 %v596, %v633
        %v653 = vmul.f32 %v597, %v633
        %v654 = vmul.f32 %v598, %v638
        %v655 = vmul.f32 %v599, %v638
        %656 = vst [vmem:[%s244] sm:$0xff] %v640
        %657 = vst [vmem:[%s244 + $0x8] sm:$0xff] %v641
        %658 = vst [vmem:[%s244 + $0x10] sm:$0xff] %v642
        %659 = vst [vmem:[%s244 + $0x18] sm:$0xff] %v643
        %660 = vst [vmem:[%s244 + $0x20] sm:$0xff] %v644
        %661 = vst [vmem:[%s244 + $0x28] sm:$0xff] %v645
        %662 = vst [vmem:[%s244 + $0x30] sm:$0xff] %v646
        %663 = vst [vmem:[%s244 + $0x38] sm:$0xff] %v647
        %664 = vst [vmem:[%s244 + $0x40] sm:$0xff] %v648
        %665 = vst [vmem:[%s244 + $0x48] sm:$0xff] %v649
        %666 = vst [vmem:[%s244 + $0x50] sm:$0xff] %v650
        %667 = vst [vmem:[%s244 + $0x58] sm:$0xff] %v651
        %668 = vst [vmem:[%s244 + $0x60] sm:$0xff] %v652
        %669 = vst [vmem:[%s244 + $0x68] sm:$0xff] %v653
        %670 = vst [vmem:[%s244 + $0x70] sm:$0xff] %v654
        %671 = vst [vmem:[%s244 + $0x78] sm:$0xff] %v655
        %s672 = sand.u32 %s140, 1
        %s673 = scalar_lea.sflag [#allocation5], %s672
        %s674 = sand.u32 %s140, 1
        %s675 = smul.addr %s674, 128
        %s676 = scalar_lea.vmem [#allocation6], %s675
        // Predicated region
        $region45: #{tpu_custom_call.1} parent=39 // pred_check
          %p677 = pneg %p150
        $region46: #{tpu_custom_call.1} parent=39 // pred_check_branch
          %679 = sbr.rel (%p677) target = $region48
        $region47: #{tpu_custom_call.1} parent=39 // pred_region
          %681 = vsyncadd %s673, 0
          %s682 = smul.addr %s22, 16
          %s683 = smul.addr %s682, 8
          %s684 = scalar_lea.hbm %s5, %s683
          %s685 = sshll.u32 %s676, 4
          %s686 = int_to_ptr.vmem [resolvable:$true] %s685
          %s687 = sshll.u32 %s684, 4
          %s688 = int_to_ptr.hbm [resolvable:$true] %s687
          %693 = dma.vmem_to_hbm [thread:$0]  %s686, 2048, %s688, %s673, 256, 256, 16
        $region48: #{tpu_custom_call.1} parent=39 // pred_fallthru
          _
      $region40: #{tpu_custom_call.1} parent=5 // pred_fallthru
        _
      %p694 = scmp.le.s32.totalorder 2, %s17
      // Predicated region
      $region49: #{tpu_custom_call.1} parent=5 // pred_check
        %p695 = pneg %p694
      $region50: #{tpu_custom_call.1} parent=5 // pred_check_branch
        %697 = sbr.rel (%p695) target = $region52
      $region51: #{tpu_custom_call.1} parent=5 // pred_region
        %s698 = ssub.s32 %s17, 2
        // Predicated region
        $region53: #{tpu_custom_call.1} parent=51 // pred_check
          %p699 = pneg %p156
        $region54: #{tpu_custom_call.1} parent=51 // pred_check_branch
          %701 = sbr.rel (%p699) target = $region56
        $region55: #{tpu_custom_call.1} parent=51 // pred_region
          %s702 = sand.u32 %s141, 1
          %s703 = scalar_lea.sflag [#allocation5], %s702
          %s704 = sand.u32 %s141, 1
          %s705 = smul.addr %s704, 128
          %s706 = scalar_lea.vmem [#allocation6], %s705
          %708 = dma.done %s703, 2048
        $region56: #{tpu_custom_call.1} parent=51 // pred_fallthru
          _
      $region52: #{tpu_custom_call.1} parent=5 // pred_fallthru
        _
    $region6: #{tpu_custom_call.1} parent=1 // loop_footer
      %s21 = sadd.s32 1, %s17
    $region7: #{tpu_custom_call.1} parent=1 // loop_footer_branch
      %16 = sbr.rel target = $region3
    $region8: #{tpu_custom_call.1} parent=1 // loop_exit
      _
    %709 = vsyncpa [#allocation4], 1
    %s710 = scalar_lea.sflag [#allocation4], 1
    %711 = vsyncpa %s710, 1
    %712 = vsyncpa [#allocation5], 1
    %s713 = scalar_lea.sflag [#allocation5], 1
    %714 = vsyncpa %s713, 1

</llo_original>
